<compile_context>
chip_gen: v6e
topology: v6e:2x2x1
jax: 0.10.0
libtpu: 0.0.40
codegen_flags: <defaults>
</compile_context>

<pallas_src>
import jax
import jax.numpy as jnp
from jax.experimental import pallas as pl
from jax.experimental.pallas import tpu as pltpu

PACK = 8        # logical rows folded into the lane axis (F=16 -> 16*8 = 128 lanes)
LANE = 128
SUBLANE = 8


def _leaky_relu(x, slope=0.2):
    return jnp.where(x >= 0, x, slope * x)


def _round_up(x, m):
    return ((x + m - 1) // m) * m


def danet_kernel(x_ref, w1_ref, b1_ref, w2_ref, b2_ref, w3_ref, b3_ref, o_ref):
    cdt = w1_ref.dtype
    # In-kernel cast (VPU, free) instead of a wrapper-side astype HBM pass.
    x = x_ref[...].astype(cdt)
    # Layer 1: Linear + LeakyReLU(0.2)    (block-diagonal packed weights)
    h = jnp.dot(x, w1_ref[...], preferred_element_type=jnp.float32)
    h = _leaky_relu(h + b1_ref[...])
    # Layer 2: Linear + LeakyReLU(0.2)
    h = jnp.dot(h.astype(cdt), w2_ref[...], preferred_element_type=jnp.float32)
    h = _leaky_relu(h + b2_ref[...])
    # Layer 3: Linear + LeakyReLU(0.2)  (PyTorch module applies LeakyReLU after the last Linear)
    h = jnp.dot(h.astype(cdt), w3_ref[...], preferred_element_type=jnp.float32)
    h = _leaky_relu(h + b3_ref[...])
    o_ref[...] = h.astype(o_ref.dtype)


def _pick_tile_p(num_p, requested_p, cap_p):
    """Pick the packed-row tile: big (amortize ~0.35us/step), VMEM-capped, sublane-aligned,
    and with a best-effort even step count so v7x's two TCs split the 'parallel' axis."""
    tile = min(int(requested_p), int(cap_p))
    if num_p <= tile:
        return num_p                                   # single step, full-extent block
    tile = max(SUBLANE, (tile // SUBLANE) * SUBLANE)
    steps = pl.cdiv(num_p, tile)
    if steps % 2:                                      # prefer an even number of grid steps
        tile = max(SUBLANE, _round_up(pl.cdiv(num_p, steps + 1), SUBLANE))
    return min(tile, num_p)


def danet_forward(x, params, *, compute_dtype=jnp.bfloat16, out_dtype=None,
                  tile_rows=None):
    """x: (B, num_features). params: w1,b1,w2,b2,w3,b3 with weights as (in, out)."""
    B, F = x.shape
    H = params["w1"].shape[1]
    D = params["w3"].shape[1]
    compute_dtype = jnp.dtype(compute_dtype)
    out_dtype = jnp.dtype(out_dtype) if out_dtype is not None else jnp.dtype(x.dtype)

    # ---- lane packing: fold PACK rows into the lane axis ------------------------------
    rem = B % PACK
    if rem:
        # TODO(synk): sub-pack ragged batches still take one jnp.pad pass over x
        # (<= PACK-1 zero rows); batches that are a multiple of 8 are copy-free.
        x = jnp.pad(x, ((0, PACK - rem), (0, 0)))
    Bpad = x.shape[0]
    Bp = Bpad // PACK
    x_p = x.reshape(Bp, F * PACK)            # contiguous row-major reshape: no data movement

    # ---- block-diagonal weights / tiled biases (tiny, built per call) ------------------
    eye = jnp.eye(PACK, dtype=jnp.float32)
    w1 = jnp.kron(eye, params["w1"].astype(jnp.float32)).astype(compute_dtype)
    w2 = jnp.kron(eye, params["w2"].astype(jnp.float32)).astype(compute_dtype)
    w3 = jnp.kron(eye, params["w3"].astype(jnp.float32)).astype(compute_dtype)
    b1 = jnp.tile(params["b1"].reshape(1, H).astype(jnp.float32), (1, PACK))
    b2 = jnp.tile(params["b2"].reshape(1, H).astype(jnp.float32), (1, PACK))
    b3 = jnp.tile(params["b3"].reshape(1, D).astype(jnp.float32), (1, PACK))

    Fp, Hp, Dp = F * PACK, H * PACK, D * PACK

    # ---- batch-tile selection with a padded-lane-aware VMEM budget ---------------------
    x_it = jnp.dtype(x.dtype).itemsize
    c_it = compute_dtype.itemsize
    o_it = out_dtype.itemsize
    per_row = (2 * _round_up(Fp, LANE) * x_it          # double-buffered x block
               + 2 * _round_up(Dp, LANE) * o_it        # double-buffered out block (lane-padded in VMEM)
               + 2 * Hp * 4 + 2 * Hp * c_it)           # f32 intermediates + casts for next matmul
    cap_p = max(SUBLANE, ((24 << 20) // per_row) // SUBLANE * SUBLANE)   # ~24 MiB, safe on v7x

    req_p = 1024 if tile_rows is None else max(1, int(tile_rows) // PACK)  # ~8192 rows/step default
    tile_p = _pick_tile_p(Bp, req_p, cap_p)
    grid_p = pl.cdiv(Bp, tile_p)                        # last block may be partial (Pallas clips)

    w_bytes = 2 * (Fp * Hp + Hp * Hp + Hp * Dp) * c_it + 2 * (2 * Hp + Dp) * 4
    vmem_limit = int(min(64 << 20, max(16 << 20, per_row * tile_p + w_bytes + (4 << 20))))

    flops = 2 * Bp * (Fp * Hp + Hp * Hp + Hp * Dp)
    bytes_accessed = (Bp * Fp * x_it + Bp * Dp * o_it
                      + (Fp * Hp + Hp * Hp + Hp * Dp) * c_it + (2 * Hp + Dp) * 4)

    full = lambda shape: pl.BlockSpec(shape, lambda i: tuple(0 for _ in shape))

    out_p = pl.pallas_call(
        danet_kernel,
        out_shape=jax.ShapeDtypeStruct((Bp, Dp), out_dtype),
        grid_spec=pltpu.PrefetchScalarGridSpec(
            num_scalar_prefetch=0,
            grid=(grid_p,),
            in_specs=[
                pl.BlockSpec((tile_p, Fp), lambda i: (i, 0)),   # streamed, lane-dense x
                full((Fp, Hp)), full((1, Hp)),                  # w1, b1 (VMEM-resident)
                full((Hp, Hp)), full((1, Hp)),                  # w2, b2
                full((Hp, Dp)), full((1, Dp)),                  # w3, b3
            ],
            out_specs=pl.BlockSpec((tile_p, Dp), lambda i: (i, 0)),
        ),
        compiler_params=pltpu.CompilerParams(
            dimension_semantics=("parallel",),
            vmem_limit_bytes=vmem_limit),
        cost_estimate=pl.CostEstimate(
            flops=int(flops), transcendentals=0, bytes_accessed=int(bytes_accessed)),
    )(x_p, w1, b1, w2, b2, w3, b3)

    out = out_p.reshape(Bpad, D)              # contiguous reshape: free
    return out[:B] if Bpad != B else out      # tiny (B, D) slice only when B % 8 != 0


def init_params(key, num_features, num_domain, hidden=32):
    """PyTorch-Linear-style init (uniform(-1/sqrt(fan_in), 1/sqrt(fan_in))), weights as (in,out)."""
    ks = jax.random.split(key, 6)

    def linear(kw, kb, fan_in, fan_out):
        bound = 1.0 / jnp.sqrt(fan_in)
        w = jax.random.uniform(kw, (fan_in, fan_out), jnp.float32, -bound, bound)
        b = jax.random.uniform(kb, (1, fan_out), jnp.float32, -bound, bound)
        return w, b

    w1, b1 = linear(ks[0], ks[1], num_features, hidden)
    w2, b2 = linear(ks[2], ks[3], hidden, hidden)
    w3, b3 = linear(ks[4], ks[5], hidden, num_domain)
    return dict(w1=w1, b1=b1, w2=w2, b2=b2, w3=w3, b3=b3)


def danet_reference(x, p):
    h = _leaky_relu(x @ p["w1"] + p["b1"])
    h = _leaky_relu(h @ p["w2"] + p["b2"])
    h = _leaky_relu(h @ p["w3"] + p["b3"])
    return h


if __name__ == "__main__":
    num_features = 16
    num_domain = 4

    key = jax.random.PRNGKey(0)
    k_p, k_x1, k_x2 = jax.random.split(key, 3)
    params = init_params(k_p, num_features, num_domain)

    # --- small batch, f32 compute: tight correctness check (single grid step) ---
    x1 = jax.random.normal(k_x1, (64, num_features), jnp.float32)
    o1 = jax.block_until_ready(danet_forward(x1, params, compute_dtype=jnp.float32))
    r1 = danet_reference(x1, params)
    assert o1.shape == (64, num_domain)
    assert jnp.allclose(o1, r1, atol=1e-4, rtol=1e-4), "f32 mismatch vs reference"

    # --- ragged batch + bf16 compute + bf16 output + forced multi-step (partial last block) ---
    x2 = jax.random.normal(k_x2, (100, num_features), jnp.float32)
    o2 = jax.block_until_ready(
        danet_forward(x2, params, compute_dtype=jnp.bfloat16,
                      out_dtype=jnp.bfloat16, tile_rows=32))
    r2 = danet_reference(x2, params)
    assert o2.shape == (100, num_domain)
    assert jnp.allclose(o2.astype(jnp.float32), r2, atol=5e-2, rtol=5e-2), "bf16 mismatch vs reference"

    print("KERNEL_OK")
</pallas_src>

<mosaic_0001>
module attributes {stable_mosaic.version = 11 : i64} {
  func.func @danet_kernel(%arg0: i32, %arg1: memref<8x128xf32, #tpu.memory_space<vmem>>, %arg2: memref<128x256xf32, #tpu.memory_space<vmem>>, %arg3: memref<1x256xf32, #tpu.memory_space<vmem>>, %arg4: memref<256x256xf32, #tpu.memory_space<vmem>>, %arg5: memref<1x256xf32, #tpu.memory_space<vmem>>, %arg6: memref<256x32xf32, #tpu.memory_space<vmem>>, %arg7: memref<1x32xf32, #tpu.memory_space<vmem>>, %arg8: memref<8x32xf32, #tpu.memory_space<vmem>>) attributes {dimension_semantics = [#tpu.dimension_semantics<parallel>], iteration_bounds = array<i64: 1>, scalar_prefetch = 0 : i64, scratch_operands = 0 : i64, tpu.core_type = #tpu.core_type<tc>, window_params = [{transform_indices = @transform_0, window_bounds = array<i64: 8, 128>}, {pipeline_mode = #tpu.pipeline_mode<synchronous>, transform_indices = @transform_1, window_bounds = array<i64: 128, 256>}, {pipeline_mode = #tpu.pipeline_mode<synchronous>, transform_indices = @transform_2, window_bounds = array<i64: 1, 256>}, {pipeline_mode = #tpu.pipeline_mode<synchronous>, transform_indices = @transform_3, window_bounds = array<i64: 256, 256>}, {pipeline_mode = #tpu.pipeline_mode<synchronous>, transform_indices = @transform_4, window_bounds = array<i64: 1, 256>}, {pipeline_mode = #tpu.pipeline_mode<synchronous>, transform_indices = @transform_5, window_bounds = array<i64: 256, 32>}, {pipeline_mode = #tpu.pipeline_mode<synchronous>, transform_indices = @transform_6, window_bounds = array<i64: 1, 32>}, {transform_indices = @transform_7, window_bounds = array<i64: 8, 32>}]} {
    %c0 = arith.constant 0 : index
    %c0_0 = arith.constant 0 : index
    %0 = vector.load %arg1[%c0, %c0_0] : memref<8x128xf32, #tpu.memory_space<vmem>>, vector<8x128xf32>
    %c0_1 = arith.constant 0 : index
    %c0_2 = arith.constant 0 : index
    %1 = vector.load %arg2[%c0_1, %c0_2] : memref<128x256xf32, #tpu.memory_space<vmem>>, vector<128x256xf32>
    %cst = arith.constant dense<0.000000e+00> : vector<8x256xf32>
    %2 = tpu.matmul %0, %1, %cst {dimension_numbers = #tpu.dot_dimension_numbers<[1], [0], [0], [1], [0, 0, 1, 1], [], []>} : vector<8x128xf32>, vector<128x256xf32>, vector<8x256xf32> -> vector<8x256xf32>
    %c0_3 = arith.constant 0 : index
    %c0_4 = arith.constant 0 : index
    %3 = vector.load %arg3[%c0_3, %c0_4] : memref<1x256xf32, #tpu.memory_space<vmem>>, vector<1x256xf32>
    %4 = vector.broadcast %3 : vector<1x256xf32> to vector<8x256xf32>
    %5 = arith.addf %2, %4 : vector<8x256xf32>
    %cst_5 = arith.constant 0.000000e+00 : f32
    %6 = vector.broadcast %cst_5 : f32 to vector<8x256xf32>
    %7 = arith.cmpf oge, %5, %6 : vector<8x256xf32>
    %cst_6 = arith.constant 2.000000e-01 : f32
    %8 = vector.broadcast %cst_6 : f32 to vector<8x256xf32>
    %9 = arith.mulf %8, %5 : vector<8x256xf32>
    %10 = arith.select %7, %5, %9 : vector<8x256xi1>, vector<8x256xf32>
    %c0_7 = arith.constant 0 : index
    %c0_8 = arith.constant 0 : index
    %11 = vector.load %arg4[%c0_7, %c0_8] : memref<256x256xf32, #tpu.memory_space<vmem>>, vector<256x256xf32>
    %cst_9 = arith.constant dense<0.000000e+00> : vector<8x256xf32>
    %12 = tpu.matmul %10, %11, %cst_9 {dimension_numbers = #tpu.dot_dimension_numbers<[1], [0], [0], [1], [0, 0, 1, 1], [], []>} : vector<8x256xf32>, vector<256x256xf32>, vector<8x256xf32> -> vector<8x256xf32>
    %c0_10 = arith.constant 0 : index
    %c0_11 = arith.constant 0 : index
    %13 = vector.load %arg5[%c0_10, %c0_11] : memref<1x256xf32, #tpu.memory_space<vmem>>, vector<1x256xf32>
    %14 = vector.broadcast %13 : vector<1x256xf32> to vector<8x256xf32>
    %15 = arith.addf %12, %14 : vector<8x256xf32>
    %cst_12 = arith.constant 0.000000e+00 : f32
    %16 = vector.broadcast %cst_12 : f32 to vector<8x256xf32>
    %17 = arith.cmpf oge, %15, %16 : vector<8x256xf32>
    %cst_13 = arith.constant 2.000000e-01 : f32
    %18 = vector.broadcast %cst_13 : f32 to vector<8x256xf32>
    %19 = arith.mulf %18, %15 : vector<8x256xf32>
    %20 = arith.select %17, %15, %19 : vector<8x256xi1>, vector<8x256xf32>
    %c0_14 = arith.constant 0 : index
    %c0_15 = arith.constant 0 : index
    %21 = vector.load %arg6[%c0_14, %c0_15] : memref<256x32xf32, #tpu.memory_space<vmem>>, vector<256x32xf32>
    %cst_16 = arith.constant dense<0.000000e+00> : vector<8x32xf32>
    %22 = tpu.matmul %20, %21, %cst_16 {dimension_numbers = #tpu.dot_dimension_numbers<[1], [0], [0], [1], [0, 0, 1, 1], [], []>} : vector<8x256xf32>, vector<256x32xf32>, vector<8x32xf32> -> vector<8x32xf32>
    %c0_17 = arith.constant 0 : index
    %c0_18 = arith.constant 0 : index
    %23 = vector.load %arg7[%c0_17, %c0_18] : memref<1x32xf32, #tpu.memory_space<vmem>>, vector<1x32xf32>
    %24 = vector.broadcast %23 : vector<1x32xf32> to vector<8x32xf32>
    %25 = arith.addf %22, %24 : vector<8x32xf32>
    %cst_19 = arith.constant 0.000000e+00 : f32
    %26 = vector.broadcast %cst_19 : f32 to vector<8x32xf32>
    %27 = arith.cmpf oge, %25, %26 : vector<8x32xf32>
    %cst_20 = arith.constant 2.000000e-01 : f32
    %28 = vector.broadcast %cst_20 : f32 to vector<8x32xf32>
    %29 = arith.mulf %28, %25 : vector<8x32xf32>
    %30 = arith.select %27, %25, %29 : vector<8x32xi1>, vector<8x32xf32>
    %c0_21 = arith.constant 0 : index
    %c0_22 = arith.constant 0 : index
    %31 = vector.load %arg8[%c0_21, %c0_22] : memref<8x32xf32, #tpu.memory_space<vmem>>, vector<8x32xf32>
    tpu.vector_store %arg8[%c0_21, %c0_22], %30 {strides = array<i32>} : memref<8x32xf32, #tpu.memory_space<vmem>>, vector<8x32xf32>,
    return
  }
  func.func @transform_0(%arg0: i32) -> (i32, i32) {
    %c0_i32 = arith.constant 0 : i32
    %c0_i32_0 = arith.constant 0 : i32
    return %arg0, %c0_i32 : i32, i32
  }
  func.func @transform_1(%arg0: i32) -> (i32, i32) {
    %c0_i32 = arith.constant 0 : i32
    %c0_i32_0 = arith.constant 0 : i32
    %c0_i32_1 = arith.constant 0 : i32
    return %c0_i32, %c0_i32_0 : i32, i32
  }
  func.func @transform_2(%arg0: i32) -> (i32, i32) {
    %c0_i32 = arith.constant 0 : i32
    %c0_i32_0 = arith.constant 0 : i32
    %c0_i32_1 = arith.constant 0 : i32
    return %c0_i32, %c0_i32_0 : i32, i32
  }
  func.func @transform_3(%arg0: i32) -> (i32, i32) {
    %c0_i32 = arith.constant 0 : i32
    %c0_i32_0 = arith.constant 0 : i32
    %c0_i32_1 = arith.constant 0 : i32
    return %c0_i32, %c0_i32_0 : i32, i32
  }
  func.func @transform_4(%arg0: i32) -> (i32, i32) {
    %c0_i32 = arith.constant 0 : i32
    %c0_i32_0 = arith.constant 0 : i32
    %c0_i32_1 = arith.constant 0 : i32
    return %c0_i32, %c0_i32_0 : i32, i32
  }
  func.func @transform_5(%arg0: i32) -> (i32, i32) {
    %c0_i32 = arith.constant 0 : i32
    %c0_i32_0 = arith.constant 0 : i32
    %c0_i32_1 = arith.constant 0 : i32
    return %c0_i32, %c0_i32_0 : i32, i32
  }
  func.func @transform_6(%arg0: i32) -> (i32, i32) {
    %c0_i32 = arith.constant 0 : i32
    %c0_i32_0 = arith.constant 0 : i32
    %c0_i32_1 = arith.constant 0 : i32
    return %c0_i32, %c0_i32_0 : i32, i32
  }
  func.func @transform_7(%arg0: i32) -> (i32, i32) {
    %c0_i32 = arith.constant 0 : i32
    %c0_i32_0 = arith.constant 0 : i32
    return %arg0, %c0_i32 : i32, i32
  }
}

</mosaic_0001>

<llo_original>
// kernel: tpu_custom_call.1
$region0: #{tpu_custom_call.1}
  #allocation0 [shape = 'u32[]', space=smem, size = 0x4, offset = 0x4, fixed_abs, tag = 'smem constant byte address 0x4 - core index']
  #allocation1 [shape = 'u32[144,128]{1,0:T(1,128)}', space=vmem, size = 0x12000, scoped, tag = 'internal scratch']
  %s0 = inlined_call_operand.vmem [shape: f32[8,128], index: 0, kind: input, shape index: {}]
  %s1 = inlined_call_operand.vmem [shape: f32[128,256], index: 1, kind: input, shape index: {}]
  %s2 = inlined_call_operand.vmem [shape: f32[1,256], index: 2, kind: input, shape index: {}]
  %s3 = inlined_call_operand.hbm [shape: f32[256,256], index: 3, kind: input, shape index: {}]
  %s4 = inlined_call_operand.vmem [shape: f32[1,256], index: 4, kind: input, shape index: {}]
  %s5 = inlined_call_operand.vmem [shape: f32[256,32], index: 5, kind: input, shape index: {}]
  %s6 = inlined_call_operand.vmem [shape: f32[1,32], index: 6, kind: input, shape index: {}]
  %s7 = inlined_call_operand.hbm [shape: f32[8,32], index: 7, kind: output, shape index: {}]
  %s8 = sld [smem:[#allocation0]]
  $region42: #{tpu_custom_call.1} parent=0
    _
  %s10 = ssub.s32 1, %s8
  %s11 = scalar_select 0, %s10, %s8
  $region1: #{tpu_custom_call.1} parent=0
    #allocation2 [shape = 'u8[262144]{0}', space=vmem, size = 0x40000, scoped, tag = 'input window, operand 3, single buffered']
    #allocation3 [shape = 's32[1]{0}', space=sflag, size = 0x4, scoped, tag = 'scoped memory for tpu_custom_call.1']
    #allocation4 [shape = 's32[1]{0}', space=sflag, size = 0x4, scoped, tag = 'scoped memory for tpu_custom_call.1']
    #allocation5 [shape = 'u8[4096]{0}', space=vmem, size = 0x1000, scoped, tag = 'output window, operand 0, single buffered']
    %12 = vsyncpa [#allocation3], 0
    %13 = vsyncpa [#allocation4], 0
    // Predicated region
    $region2: #{tpu_custom_call.1} parent=1 // pred_check
      _
    $region3: #{tpu_custom_call.1} parent=1 // pred_check_branch
      %15 = sbr.rel (0) target = $region5
    $region4: #{tpu_custom_call.1} parent=1 // pred_region
      _
    $region5: #{tpu_custom_call.1} parent=1 // pred_fallthru
      _
    // Predicated region
    $region6: #{tpu_custom_call.1} parent=1 // pred_check
      _
    $region7: #{tpu_custom_call.1} parent=1 // pred_check_branch
      %17 = sbr.rel (0) target = $region9
    $region8: #{tpu_custom_call.1} parent=1 // pred_region
      _
    $region9: #{tpu_custom_call.1} parent=1 // pred_fallthru
      _
    // Predicated region
    $region10: #{tpu_custom_call.1} parent=1 // pred_check
      _
    $region11: #{tpu_custom_call.1} parent=1 // pred_check_branch
      %19 = sbr.rel (0) target = $region13
    $region12: #{tpu_custom_call.1} parent=1 // pred_region
      _
    $region13: #{tpu_custom_call.1} parent=1 // pred_fallthru
      _
    // Predicated region
    $region14: #{tpu_custom_call.1} parent=1 // pred_check
      _
    $region15: #{tpu_custom_call.1} parent=1 // pred_check_branch
      %21 = sbr.rel (0) target = $region17
    $region16: #{tpu_custom_call.1} parent=1 // pred_region
      %s23 = ssub.s32 8192, 8192
      %24 = vsyncadd [#allocation3], %s23
      %s25 = sshll.u32 [#allocation2], 4
      %s26 = int_to_ptr.vmem [resolvable:$true] %s25
      %31 = dma.hbm_to_vmem [thread:$0]  %s3, 8192, %s26, [#allocation3], 256, 256, 16
    $region17: #{tpu_custom_call.1} parent=1 // pred_fallthru
      _
    // Predicated region
    $region18: #{tpu_custom_call.1} parent=1 // pred_check
      _
    $region19: #{tpu_custom_call.1} parent=1 // pred_check_branch
      %33 = sbr.rel (0) target = $region21
    $region20: #{tpu_custom_call.1} parent=1 // pred_region
      _
    $region21: #{tpu_custom_call.1} parent=1 // pred_fallthru
      _
    // Predicated region
    $region22: #{tpu_custom_call.1} parent=1 // pred_check
      _
    $region23: #{tpu_custom_call.1} parent=1 // pred_check_branch
      %35 = sbr.rel (0) target = $region25
    $region24: #{tpu_custom_call.1} parent=1 // pred_region
      _
    $region25: #{tpu_custom_call.1} parent=1 // pred_fallthru
      _
    // Predicated region
    $region26: #{tpu_custom_call.1} parent=1 // pred_check
      _
    $region27: #{tpu_custom_call.1} parent=1 // pred_check_branch
      %37 = sbr.rel (0) target = $region29
    $region28: #{tpu_custom_call.1} parent=1 // pred_region
      _
    $region29: #{tpu_custom_call.1} parent=1 // pred_fallthru
      _
    // Predicated region
    $region30: #{tpu_custom_call.1} parent=1 // pred_check
      _
    $region31: #{tpu_custom_call.1} parent=1 // pred_check_branch
      %39 = sbr.rel (0) target = $region33
    $region32: #{tpu_custom_call.1} parent=1 // pred_region
      %40 = dma.done [#allocation3], 8192
    $region33: #{tpu_custom_call.1} parent=1 // pred_fallthru
      _
    %v41 = vld [vmem:[%s0] sm:$0xff]
    %v42 = vld [vmem:[%s1] sm:$0xff]
    %v43 = vld [vmem:[%s1 + $0x8] sm:$0xff]
    %v44 = vld [vmem:[%s1 + $0x10] sm:$0xff]
    %v45 = vld [vmem:[%s1 + $0x18] sm:$0xff]
    %v46 = vld [vmem:[%s1 + $0x20] sm:$0xff]
    %v47 = vld [vmem:[%s1 + $0x28] sm:$0xff]
    %v48 = vld [vmem:[%s1 + $0x30] sm:$0xff]
    %v49 = vld [vmem:[%s1 + $0x38] sm:$0xff]
    %v50 = vld [vmem:[%s1 + $0x40] sm:$0xff]
    %v51 = vld [vmem:[%s1 + $0x48] sm:$0xff]
    %v52 = vld [vmem:[%s1 + $0x50] sm:$0xff]
    %v53 = vld [vmem:[%s1 + $0x58] sm:$0xff]
    %v54 = vld [vmem:[%s1 + $0x60] sm:$0xff]
    %v55 = vld [vmem:[%s1 + $0x68] sm:$0xff]
    %v56 = vld [vmem:[%s1 + $0x70] sm:$0xff]
    %v57 = vld [vmem:[%s1 + $0x78] sm:$0xff]
    %v58 = vld [vmem:[%s1 + $0x80] sm:$0xff]
    %v59 = vld [vmem:[%s1 + $0x88] sm:$0xff]
    %v60 = vld [vmem:[%s1 + $0x90] sm:$0xff]
    %v61 = vld [vmem:[%s1 + $0x98] sm:$0xff]
    %v62 = vld [vmem:[%s1 + $0xa0] sm:$0xff]
    %v63 = vld [vmem:[%s1 + $0xa8] sm:$0xff]
    %v64 = vld [vmem:[%s1 + $0xb0] sm:$0xff]
    %v65 = vld [vmem:[%s1 + $0xb8] sm:$0xff]
    %v66 = vld [vmem:[%s1 + $0xc0] sm:$0xff]
    %v67 = vld [vmem:[%s1 + $0xc8] sm:$0xff]
    %v68 = vld [vmem:[%s1 + $0xd0] sm:$0xff]
    %v69 = vld [vmem:[%s1 + $0xd8] sm:$0xff]
    %v70 = vld [vmem:[%s1 + $0xe0] sm:$0xff]
    %v71 = vld [vmem:[%s1 + $0xe8] sm:$0xff]
    %v72 = vld [vmem:[%s1 + $0xf0] sm:$0xff]
    %v73 = vld [vmem:[%s1 + $0xf8] sm:$0xff]
    %v74 = vld [vmem:[%s2] sm:$0x3]
    %v76 = vlaneseq
    %v77 = vshrl.u32 %v76, 7
    %v78 = vsub.s32 0, %v77
    %v79 = vrot.slane %v74, %v78
    %v80 = vlaneseq
    %v81 = vshrl.u32 %v80, 7
    %v82 = vsub.s32 1, %v81
    %v83 = vrot.slane %v74, %v82
    %86 = vmatprep.subr.mxu0 %v73
    %87 = vmatpush1.msra.mxu0 %v72
    %88 = vmatprep.subr.mxu0 %v71
    %89 = vmatpush1.msra.mxu0 %v70
    %90 = vmatprep.subr.mxu0 %v69
    %91 = vmatpush1.msra.mxu0 %v68
    %92 = vmatprep.subr.mxu0 %v67
    %93 = vmatpush1.msra.mxu0 %v66
    %94 = vmatprep.subr.mxu0 %v65
    %95 = vmatpush1.msra.mxu0 %v64
    %96 = vmatprep.subr.mxu0 %v63
    %97 = vmatpush1.msra.mxu0 %v62
    %98 = vmatprep.subr.mxu0 %v61
    %99 = vmatpush1.msra.mxu0 %v60
    %100 = vmatprep.subr.mxu0 %v59
    %101 = vmatpush1.msra.mxu0 %v58
    %102 = vmatprep.subr.mxu0 %v57
    %103 = vmatpush1.msra.mxu0 %v56
    %104 = vmatprep.subr.mxu0 %v55
    %105 = vmatpush1.msra.mxu0 %v54
    %106 = vmatprep.subr.mxu0 %v53
    %107 = vmatpush1.msra.mxu0 %v52
    %108 = vmatprep.subr.mxu0 %v51
    %109 = vmatpush1.msra.mxu0 %v50
    %110 = vmatprep.subr.mxu0 %v49
    %111 = vmatpush1.msra.mxu0 %v48
    %112 = vmatprep.subr.mxu0 %v47
    %113 = vmatpush1.msra.mxu0 %v46
    %114 = vmatprep.subr.mxu0 %v45
    %115 = vmatpush1.msra.mxu0 %v44
    %116 = vmatprep.subr.mxu0 %v43
    %117 = vmatpush1.msra.mxu0 %v42
    %118 = vmatprep.subr.mxu0 0.0
    %119 = vmatpush2.msra.mxu0 0.0
    %120 = vmatprep.subr.mxu0 0.0
    %121 = vmatpush2.msra.mxu0 0.0
    %122 = vmatprep.subr.mxu0 0.0
    %123 = vmatpush2.msra.mxu0 0.0
    %124 = vmatprep.subr.mxu0 0.0
    %125 = vmatpush2.msra.mxu0 0.0
    %126 = vmatprep.subr.mxu0 0.0
    %127 = vmatpush2.msra.mxu0 0.0
    %128 = vmatprep.subr.mxu0 0.0
    %129 = vmatpush2.msra.mxu0 0.0
    %130 = vmatprep.subr.mxu0 0.0
    %131 = vmatpush2.msra.mxu0 0.0
    %132 = vmatprep.subr.mxu0 0.0
    %133 = vmatpush2.msra.mxu0 0.0
    %134 = vmatprep.subr.mxu0 0.0
    %135 = vmatpush2.msra.mxu0 0.0
    %136 = vmatprep.subr.mxu0 0.0
    %137 = vmatpush2.msra.mxu0 0.0
    %138 = vmatprep.subr.mxu0 0.0
    %139 = vmatpush2.msra.mxu0 0.0
    %140 = vmatprep.subr.mxu0 0.0
    %141 = vmatpush2.msra.mxu0 0.0
    %142 = vmatprep.subr.mxu0 0.0
    %143 = vmatpush2.msra.mxu0 0.0
    %144 = vmatprep.subr.mxu0 0.0
    %145 = vmatpush2.msra.mxu0 0.0
    %146 = vmatprep.subr.mxu0 0.0
    %147 = vmatpush2.msra.mxu0 0.0
    %148 = vmatprep.subr.mxu0 0.0
    %149 = vmatpush2.msra.mxu0 0.0
    %150 = vmatprep.mubr.f32.mxu0 0.0
    %151 = vmatmul.mubr.f32.gmra.mxu0 %v41
    %v152 = vpop.f32.mrf.mxu0
    %v153 = vadd.f32 %v79, %v152
    %v154 = vpop.f32.mrf.mxu0
    %v155 = vadd.f32 %v83, %v154
    %156 = vdwg.mxu0
    %vm157 = vcmp.ge.f32.partialorder %v153, 0.0
    %vm158 = vcmp.ge.f32.partialorder %v155, 0.0
    %v159 = vmul.f32 %v153, 0.2
    %v160 = vmul.f32 %v155, 0.2
    %v161 = vsel %vm157, %v153, %v159
    %v162 = vsel %vm158, %v155, %v160
    %v163 = vld [vmem:[#allocation2] sm:$0xff]
    %v164 = vld [vmem:[#allocation2 + $0x8] sm:$0xff]
    %v165 = vld [vmem:[#allocation2 + $0x10] sm:$0xff]
    %v166 = vld [vmem:[#allocation2 + $0x18] sm:$0xff]
    %v167 = vld [vmem:[#allocation2 + $0x20] sm:$0xff]
    %v168 = vld [vmem:[#allocation2 + $0x28] sm:$0xff]
    %v169 = vld [vmem:[#allocation2 + $0x30] sm:$0xff]
    %v170 = vld [vmem:[#allocation2 + $0x38] sm:$0xff]
    %v171 = vld [vmem:[#allocation2 + $0x40] sm:$0xff]
    %v172 = vld [vmem:[#allocation2 + $0x48] sm:$0xff]
    %v173 = vld [vmem:[#allocation2 + $0x50] sm:$0xff]
    %v174 = vld [vmem:[#allocation2 + $0x58] sm:$0xff]
    %v175 = vld [vmem:[#allocation2 + $0x60] sm:$0xff]
    %v176 = vld [vmem:[#allocation2 + $0x68] sm:$0xff]
    %v177 = vld [vmem:[#allocation2 + $0x70] sm:$0xff]
    %v178 = vld [vmem:[#allocation2 + $0x78] sm:$0xff]
    %v179 = vld [vmem:[#allocation2 + $0x80] sm:$0xff]
    %v180 = vld [vmem:[#allocation2 + $0x88] sm:$0xff]
    %v181 = vld [vmem:[#allocation2 + $0x90] sm:$0xff]
    %v182 = vld [vmem:[#allocation2 + $0x98] sm:$0xff]
    %v183 = vld [vmem:[#allocation2 + $0xa0] sm:$0xff]
    %v184 = vld [vmem:[#allocation2 + $0xa8] sm:$0xff]
    %v185 = vld [vmem:[#allocation2 + $0xb0] sm:$0xff]
    %v186 = vld [vmem:[#allocation2 + $0xb8] sm:$0xff]
    %v187 = vld [vmem:[#allocation2 + $0xc0] sm:$0xff]
    %v188 = vld [vmem:[#allocation2 + $0xc8] sm:$0xff]
    %v189 = vld [vmem:[#allocation2 + $0xd0] sm:$0xff]
    %v190 = vld [vmem:[#allocation2 + $0xd8] sm:$0xff]
    %v191 = vld [vmem:[#allocation2 + $0xe0] sm:$0xff]
    %v192 = vld [vmem:[#allocation2 + $0xe8] sm:$0xff]
    %v193 = vld [vmem:[#allocation2 + $0xf0] sm:$0xff]
    %v194 = vld [vmem:[#allocation2 + $0xf8] sm:$0xff]
    %v195 = vld [vmem:[#allocation2 + $0x100] sm:$0xff]
    %v196 = vld [vmem:[#allocation2 + $0x108] sm:$0xff]
    %v197 = vld [vmem:[#allocation2 + $0x110] sm:$0xff]
    %v198 = vld [vmem:[#allocation2 + $0x118] sm:$0xff]
    %v199 = vld [vmem:[#allocation2 + $0x120] sm:$0xff]
    %v200 = vld [vmem:[#allocation2 + $0x128] sm:$0xff]
    %v201 = vld [vmem:[#allocation2 + $0x130] sm:$0xff]
    %v202 = vld [vmem:[#allocation2 + $0x138] sm:$0xff]
    %v203 = vld [vmem:[#allocation2 + $0x140] sm:$0xff]
    %v204 = vld [vmem:[#allocation2 + $0x148] sm:$0xff]
    %v205 = vld [vmem:[#allocation2 + $0x150] sm:$0xff]
    %v206 = vld [vmem:[#allocation2 + $0x158] sm:$0xff]
    %v207 = vld [vmem:[#allocation2 + $0x160] sm:$0xff]
    %v208 = vld [vmem:[#allocation2 + $0x168] sm:$0xff]
    %v209 = vld [vmem:[#allocation2 + $0x170] sm:$0xff]
    %v210 = vld [vmem:[#allocation2 + $0x178] sm:$0xff]
    %v211 = vld [vmem:[#allocation2 + $0x180] sm:$0xff]
    %v212 = vld [vmem:[#allocation2 + $0x188] sm:$0xff]
    %v213 = vld [vmem:[#allocation2 + $0x190] sm:$0xff]
    %v214 = vld [vmem:[#allocation2 + $0x198] sm:$0xff]
    %v215 = vld [vmem:[#allocation2 + $0x1a0] sm:$0xff]
    %v216 = vld [vmem:[#allocation2 + $0x1a8] sm:$0xff]
    %v217 = vld [vmem:[#allocation2 + $0x1b0] sm:$0xff]
    %v218 = vld [vmem:[#allocation2 + $0x1b8] sm:$0xff]
    %v219 = vld [vmem:[#allocation2 + $0x1c0] sm:$0xff]
    %v220 = vld [vmem:[#allocation2 + $0x1c8] sm:$0xff]
    %v221 = vld [vmem:[#allocation2 + $0x1d0] sm:$0xff]
    %v222 = vld [vmem:[#allocation2 + $0x1d8] sm:$0xff]
    %v223 = vld [vmem:[#allocation2 + $0x1e0] sm:$0xff]
    %v224 = vld [vmem:[#allocation2 + $0x1e8] sm:$0xff]
    %v225 = vld [vmem:[#allocation2 + $0x1f0] sm:$0xff]
    %v226 = vld [vmem:[#allocation2 + $0x1f8] sm:$0xff]
    %v227 = vld [vmem:[%s4] sm:$0x3]
    %v229 = vlaneseq
    %v230 = vshrl.u32 %v229, 7
    %v231 = vsub.s32 0, %v230
    %v232 = vrot.slane %v227, %v231
    %v233 = vlaneseq
    %v234 = vshrl.u32 %v233, 7
    %v235 = vsub.s32 1, %v234
    %v236 = vrot.slane %v227, %v235
    %239 = vmatprep.subr.mxu0 %v194
    %240 = vmatpush1.msra.mxu0 %v193
    %241 = vmatprep.subr.mxu0 %v192
    %242 = vmatpush1.msra.mxu0 %v191
    %243 = vmatprep.subr.mxu0 %v190
    %244 = vmatpush1.msra.mxu0 %v189
    %245 = vmatprep.subr.mxu0 %v188
    %246 = vmatpush1.msra.mxu0 %v187
    %247 = vmatprep.subr.mxu0 %v186
    %248 = vmatpush1.msra.mxu0 %v185
    %249 = vmatprep.subr.mxu0 %v184
    %250 = vmatpush1.msra.mxu0 %v183
    %251 = vmatprep.subr.mxu0 %v182
    %252 = vmatpush1.msra.mxu0 %v181
    %253 = vmatprep.subr.mxu0 %v180
    %254 = vmatpush1.msra.mxu0 %v179
    %255 = vmatprep.subr.mxu0 %v178
    %256 = vmatpush1.msra.mxu0 %v177
    %257 = vmatprep.subr.mxu0 %v176
    %258 = vmatpush1.msra.mxu0 %v175
    %259 = vmatprep.subr.mxu0 %v174
    %260 = vmatpush1.msra.mxu0 %v173
    %261 = vmatprep.subr.mxu0 %v172
    %262 = vmatpush1.msra.mxu0 %v171
    %263 = vmatprep.subr.mxu0 %v170
    %264 = vmatpush1.msra.mxu0 %v169
    %265 = vmatprep.subr.mxu0 %v168
    %266 = vmatpush1.msra.mxu0 %v167
    %267 = vmatprep.subr.mxu0 %v166
    %268 = vmatpush1.msra.mxu0 %v165
    %269 = vmatprep.subr.mxu0 %v164
    %270 = vmatpush1.msra.mxu0 %v163
    %271 = vmatprep.subr.mxu0 %v226
    %272 = vmatpush2.msra.mxu0 %v225
    %273 = vmatprep.subr.mxu0 %v224
    %274 = vmatpush2.msra.mxu0 %v223
    %275 = vmatprep.subr.mxu0 %v222
    %276 = vmatpush2.msra.mxu0 %v221
    %277 = vmatprep.subr.mxu0 %v220
    %278 = vmatpush2.msra.mxu0 %v219
    %279 = vmatprep.subr.mxu0 %v218
    %280 = vmatpush2.msra.mxu0 %v217
    %281 = vmatprep.subr.mxu0 %v216
    %282 = vmatpush2.msra.mxu0 %v215
    %283 = vmatprep.subr.mxu0 %v214
    %284 = vmatpush2.msra.mxu0 %v213
    %285 = vmatprep.subr.mxu0 %v212
    %286 = vmatpush2.msra.mxu0 %v211
    %287 = vmatprep.subr.mxu0 %v210
    %288 = vmatpush2.msra.mxu0 %v209
    %289 = vmatprep.subr.mxu0 %v208
    %290 = vmatpush2.msra.mxu0 %v207
    %291 = vmatprep.subr.mxu0 %v206
    %292 = vmatpush2.msra.mxu0 %v205
    %293 = vmatprep.subr.mxu0 %v204
    %294 = vmatpush2.msra.mxu0 %v203
    %295 = vmatprep.subr.mxu0 %v202
    %296 = vmatpush2.msra.mxu0 %v201
    %297 = vmatprep.subr.mxu0 %v200
    %298 = vmatpush2.msra.mxu0 %v199
    %299 = vmatprep.subr.mxu0 %v198
    %300 = vmatpush2.msra.mxu0 %v197
    %301 = vmatprep.subr.mxu0 %v196
    %302 = vmatpush2.msra.mxu0 %v195
    %303 = vmatprep.mubr.f32.mxu0 %v162
    %304 = vmatmul.mubr.f32.gmra.mxu0 %v161
    %v305 = vpop.f32.mrf.mxu0
    %v306 = vadd.f32 %v232, %v305
    %v307 = vpop.f32.mrf.mxu0
    %v308 = vadd.f32 %v236, %v307
    %309 = vdwg.mxu0
    %vm310 = vcmp.ge.f32.partialorder %v306, 0.0
    %vm311 = vcmp.ge.f32.partialorder %v308, 0.0
    %v312 = vmul.f32 %v306, 0.2
    %v313 = vmul.f32 %v308, 0.2
    %v314 = vsel %vm310, %v306, %v312
    %v315 = vsel %vm311, %v308, %v313
    %v316 = vld [vmem:[%s5] sm:$0xff]
    %v317 = vld [vmem:[%s5 + $0x8] sm:$0xff]
    %v318 = vld [vmem:[%s5 + $0x10] sm:$0xff]
    %v319 = vld [vmem:[%s5 + $0x18] sm:$0xff]
    %v320 = vld [vmem:[%s5 + $0x20] sm:$0xff]
    %v321 = vld [vmem:[%s5 + $0x28] sm:$0xff]
    %v322 = vld [vmem:[%s5 + $0x30] sm:$0xff]
    %v323 = vld [vmem:[%s5 + $0x38] sm:$0xff]
    %v324 = vld [vmem:[%s5 + $0x40] sm:$0xff]
    %v325 = vld [vmem:[%s5 + $0x48] sm:$0xff]
    %v326 = vld [vmem:[%s5 + $0x50] sm:$0xff]
    %v327 = vld [vmem:[%s5 + $0x58] sm:$0xff]
    %v328 = vld [vmem:[%s5 + $0x60] sm:$0xff]
    %v329 = vld [vmem:[%s5 + $0x68] sm:$0xff]
    %v330 = vld [vmem:[%s5 + $0x70] sm:$0xff]
    %v331 = vld [vmem:[%s5 + $0x78] sm:$0xff]
    %v332 = vld [vmem:[%s5 + $0x80] sm:$0xff]
    %v333 = vld [vmem:[%s5 + $0x88] sm:$0xff]
    %v334 = vld [vmem:[%s5 + $0x90] sm:$0xff]
    %v335 = vld [vmem:[%s5 + $0x98] sm:$0xff]
    %v336 = vld [vmem:[%s5 + $0xa0] sm:$0xff]
    %v337 = vld [vmem:[%s5 + $0xa8] sm:$0xff]
    %v338 = vld [vmem:[%s5 + $0xb0] sm:$0xff]
    %v339 = vld [vmem:[%s5 + $0xb8] sm:$0xff]
    %v340 = vld [vmem:[%s5 + $0xc0] sm:$0xff]
    %v341 = vld [vmem:[%s5 + $0xc8] sm:$0xff]
    %v342 = vld [vmem:[%s5 + $0xd0] sm:$0xff]
    %v343 = vld [vmem:[%s5 + $0xd8] sm:$0xff]
    %v344 = vld [vmem:[%s5 + $0xe0] sm:$0xff]
    %v345 = vld [vmem:[%s5 + $0xe8] sm:$0xff]
    %v346 = vld [vmem:[%s5 + $0xf0] sm:$0xff]
    %v347 = vld [vmem:[%s5 + $0xf8] sm:$0xff]
    %v348 = vld [vmem:[%s6] sm:$0x1]
    %v350 = vlaneseq
    %v351 = vshrl.u32 %v350, 7
    %v352 = vsub.s32 0, %v351
    %v353 = vrot.slane %v348, %v352
    %355 = vmatprep.subr.mxu0 0.0
    %356 = vmatpush1.msra.mxu0 %v331
    %357 = vmatprep.subr.mxu0 0.0
    %358 = vmatpush1.msra.mxu0 %v330
    %359 = vmatprep.subr.mxu0 0.0
    %360 = vmatpush1.msra.mxu0 %v329
    %361 = vmatprep.subr.mxu0 0.0
    %362 = vmatpush1.msra.mxu0 %v328
    %363 = vmatprep.subr.mxu0 0.0
    %364 = vmatpush1.msra.mxu0 %v327
    %365 = vmatprep.subr.mxu0 0.0
    %366 = vmatpush1.msra.mxu0 %v326
    %367 = vmatprep.subr.mxu0 0.0
    %368 = vmatpush1.msra.mxu0 %v325
    %369 = vmatprep.subr.mxu0 0.0
    %370 = vmatpush1.msra.mxu0 %v324
    %371 = vmatprep.subr.mxu0 0.0
    %372 = vmatpush1.msra.mxu0 %v323
    %373 = vmatprep.subr.mxu0 0.0
    %374 = vmatpush1.msra.mxu0 %v322
    %375 = vmatprep.subr.mxu0 0.0
    %376 = vmatpush1.msra.mxu0 %v321
    %377 = vmatprep.subr.mxu0 0.0
    %378 = vmatpush1.msra.mxu0 %v320
    %379 = vmatprep.subr.mxu0 0.0
    %380 = vmatpush1.msra.mxu0 %v319
    %381 = vmatprep.subr.mxu0 0.0
    %382 = vmatpush1.msra.mxu0 %v318
    %383 = vmatprep.subr.mxu0 0.0
    %384 = vmatpush1.msra.mxu0 %v317
    %385 = vmatprep.subr.mxu0 0.0
    %386 = vmatpush1.msra.mxu0 %v316
    %387 = vmatprep.subr.mxu0 0.0
    %388 = vmatpush2.msra.mxu0 %v347
    %389 = vmatprep.subr.mxu0 0.0
    %390 = vmatpush2.msra.mxu0 %v346
    %391 = vmatprep.subr.mxu0 0.0
    %392 = vmatpush2.msra.mxu0 %v345
    %393 = vmatprep.subr.mxu0 0.0
    %394 = vmatpush2.msra.mxu0 %v344
    %395 = vmatprep.subr.mxu0 0.0
    %396 = vmatpush2.msra.mxu0 %v343
    %397 = vmatprep.subr.mxu0 0.0
    %398 = vmatpush2.msra.mxu0 %v342
    %399 = vmatprep.subr.mxu0 0.0
    %400 = vmatpush2.msra.mxu0 %v341
    %401 = vmatprep.subr.mxu0 0.0
    %402 = vmatpush2.msra.mxu0 %v340
    %403 = vmatprep.subr.mxu0 0.0
    %404 = vmatpush2.msra.mxu0 %v339
    %405 = vmatprep.subr.mxu0 0.0
    %406 = vmatpush2.msra.mxu0 %v338
    %407 = vmatprep.subr.mxu0 0.0
    %408 = vmatpush2.msra.mxu0 %v337
    %409 = vmatprep.subr.mxu0 0.0
    %410 = vmatpush2.msra.mxu0 %v336
    %411 = vmatprep.subr.mxu0 0.0
    %412 = vmatpush2.msra.mxu0 %v335
    %413 = vmatprep.subr.mxu0 0.0
    %414 = vmatpush2.msra.mxu0 %v334
    %415 = vmatprep.subr.mxu0 0.0
    %416 = vmatpush2.msra.mxu0 %v333
    %417 = vmatprep.subr.mxu0 0.0
    %418 = vmatpush2.msra.mxu0 %v332
    %419 = vmatprep.mubr.f32.mxu0 %v315
    %420 = vmatmul.mubr.f32.gmra.mxu0 %v314
    %v421 = vpop.f32.mrf.mxu0
    %v422 = vadd.f32 %v353, %v421
    %v423 = vpop.f32.mrf.mxu0
    %424 = vdwg.mxu0
    %vm425 = vcmp.ge.f32.partialorder %v422, 0.0
    %v426 = vmul.f32 %v422, 0.2
    %v427 = vsel %vm425, %v422, %v426
    %vm428 = vcmask 261120
    %429 = vst.msk [vmem:[#allocation5] sm:$0xff] %vm428, %v427
    // Predicated region
    $region34: #{tpu_custom_call.1} parent=1 // pred_check
      _
    $region35: #{tpu_custom_call.1} parent=1 // pred_check_branch
      %431 = sbr.rel (0) target = $region37
    $region36: #{tpu_custom_call.1} parent=1 // pred_region
      %s433 = ssub.s32 128, 128
      %434 = vsyncadd [#allocation4], %s433
      %s436 = sshll.u32 [#allocation5], 4
      %s437 = int_to_ptr.vmem [resolvable:$true] %s436
      %439 = dma.vmem_to_hbm [thread:$0]  %s437, 128, %s7, [#allocation4]
    $region37: #{tpu_custom_call.1} parent=1 // pred_fallthru
      _
    // Predicated region
    $region38: #{tpu_custom_call.1} parent=1 // pred_check
      _
    $region39: #{tpu_custom_call.1} parent=1 // pred_check_branch
      %441 = sbr.rel (0) target = $region41
    $region40: #{tpu_custom_call.1} parent=1 // pred_region
      %442 = dma.done [#allocation4], 128
    $region41: #{tpu_custom_call.1} parent=1 // pred_fallthru
      _
    %443 = vsyncpa [#allocation3], 1
    %444 = vsyncpa [#allocation4], 1

</llo_original>
